<compile_context>
chip_gen: v5e
topology: v5e:2x2
jax: 0.10.0
libtpu: 0.0.40
codegen_flags: <defaults>
</compile_context>

<pallas_src>
import math

import jax
import jax.numpy as jnp
from jax.experimental import pallas as pl
from jax.experimental.pallas import tpu as pltpu

_LANE = 128


def _mlp_kernel(x_ref, w1_ref, b1_ref, w2_ref, b2_ref, o_ref):
    # x_ref : (Nb, Cin,  ts)  batch/spatial tile, channels on sublanes
    # w1_ref: (Chid, Cin)     full (constant index map -> DMA hoisted)
    # b1_ref: (Chid, 1)       full (broadcasts over lanes)
    # w2_ref: (Cout, Chid)    full
    # b2_ref: (Cout, 1)       full
    # o_ref : (Nb, Cout, ts)  lane-dense output tile
    w1 = w1_ref[...]
    w2 = w2_ref[...]
    b1 = b1_ref[...].astype(jnp.float32)
    b2 = b2_ref[...].astype(jnp.float32)
    nb = x_ref.shape[0]                      # small static block size
    for b in range(nb):
        # In-register cast to the compute dtype (no-op on the pure-f32 path);
        # never a wrapper-side extra HBM pass.
        x = x_ref[b].astype(w1.dtype)
        h = jnp.dot(w1, x, preferred_element_type=jnp.float32)
        h = jnp.maximum(h + b1, 0.0)                              # ReLU, f32
        o = jnp.dot(w2, h.astype(w2.dtype), preferred_element_type=jnp.float32)
        o_ref[b] = (o + b2).astype(o_ref.dtype)


def _vmem_capacity_bytes():
    """Physical VMEM per TensorCore; conservative (v7x, 64 MiB) fallback."""
    try:
        return int(pltpu.get_tpu_info().vmem_capacity_bytes)
    except Exception:
        return 64 * 1024 * 1024


def _pick_tiles(n, hw, cin, chid, cout, x_isz, w_isz, o_isz, vmem_budget,
                max_tile=32 * 1024, target_step_bytes=1 << 20, min_steps=1):
    """Pick (batch_block, spatial_tile).

    The spatial tile is either the full HW or a multiple of 128 (lane
    constraint), grown toward `max_tile` so each grid step moves at least
    ~`target_step_bytes` of activations.  When a single step already spans
    all of HW but is still small, block over the batch instead.
    """
    weight_bytes = (chid * cin + cout * chid + chid + cout) * w_isz
    wbuf = 1 if weight_bytes > (512 << 10) else 2   # Buffered(1) for big weights

    def est(nb, t):
        io = 2 * nb * t * (cin * x_isz + cout * o_isz)   # double-buffered tiles
        tmp = t * (cin + chid + cout) * 4                # f32 temporaries (1 step)
        return io + wbuf * weight_bytes + tmp + (2 << 20)  # + Mosaic scratch margin

    # --- spatial tile ---
    if hw <= _LANE:
        ts = hw
    elif hw <= max_tile:
        ts = hw                                          # whole image in one step
        if est(1, ts) > vmem_budget:
            ts = max(_LANE, (hw // 2) // _LANE * _LANE)
    else:
        ts = (max_tile // _LANE) * _LANE
    while ts > _LANE and ts != hw and est(1, ts) > vmem_budget:
        ts = max(_LANE, (ts // 2) // _LANE * _LANE)

    # --- batch block: only when one step already covers all of HW but is small ---
    nb = 1
    if ts == hw:
        per_image = max(1, hw * cin * x_isz)
        want = min(n, max(1, -(-target_step_bytes // per_image)), 512)
        for d in range(want, 0, -1):                     # largest divisor of n <= want
            if n % d == 0 and est(d, ts) <= vmem_budget:
                nb = d
                break

    # --- keep >= min_steps grid steps (feed both v7x TensorCores) ---
    if (-(-n // nb)) * (-(-hw // ts)) < min_steps:
        if n >= 2:
            nb = max(1, n // 2)
            while nb > 1 and n % nb:
                nb -= 1
        elif hw >= 2 * _LANE:
            ts = max(_LANE, (hw // 2) // _LANE * _LANE)
    return nb, ts


def mlp_pallas(x_nchw, w1, b1, w2, b2, *, compute_dtype=None, out_dtype=None,
               spatial_tile=None, batch_tile=None):
    """Fused 1x1-conv -> ReLU -> 1x1-conv on an NCHW tensor.

    x_nchw: (N, Cin, H, W)
    w1:     (Chid, Cin)   (PyTorch conv weight with trailing 1x1 squeezed)
    b1:     (Chid,)
    w2:     (Cout, Chid)
    b2:     (Cout,)
    compute_dtype: optional matmul input dtype (e.g. jnp.bfloat16); f32 accum.
    out_dtype:     optional output store dtype (halves the store stream if bf16).
    """
    N, Cin, H, W = x_nchw.shape
    Chid = w1.shape[0]
    Cout = w2.shape[0]
    HW = H * W
    out_dtype = out_dtype or x_nchw.dtype

    # (N, Cin, H, W) -> (N, Cin, H*W): pure metadata reshape, no HBM traffic.
    x = x_nchw.reshape(N, Cin, HW)

    # Only the (tiny) weights are cast in the wrapper; the activation tile is
    # cast inside the kernel to avoid an extra read+write pass over x in HBM.
    if compute_dtype is not None:
        w1 = w1.astype(compute_dtype)
        b1 = b1.astype(compute_dtype)
        w2 = w2.astype(compute_dtype)
        b2 = b2.astype(compute_dtype)
    b1_2d = b1.reshape(Chid, 1)
    b2_2d = b2.reshape(Cout, 1)

    x_isz = jnp.dtype(x.dtype).itemsize
    w_isz = jnp.dtype(w1.dtype).itemsize
    o_isz = jnp.dtype(out_dtype).itemsize

    # Generation-aware VMEM budget / limit (v7x: 64 MiB; v5e/v6e: 128 MiB).
    vmem_cap = _vmem_capacity_bytes()
    if vmem_cap <= 64 * 1024 * 1024:
        vmem_budget, vmem_limit, min_steps = 28 << 20, 40 << 20, 2   # v7x: 2 TCs
    else:
        vmem_budget, vmem_limit, min_steps = 56 << 20, 80 << 20, 1   # v5e / v6e

    nb, ts = _pick_tiles(N, HW, Cin, Chid, Cout, x_isz, w_isz, o_isz,
                         vmem_budget, min_steps=min_steps)
    if spatial_tile is not None:
        ts = spatial_tile
    if batch_tile is not None:
        nb = batch_tile

    grid = (pl.cdiv(N, nb), pl.cdiv(HW, ts))   # ragged last blocks handled by Pallas

    weight_bytes = (Chid * Cin + Cout * Chid + Chid + Cout) * w_isz
    wspec_kwargs = {}
    if weight_bytes > (512 << 10):
        # Constant-index inputs still get 2 pipeline buffers by default; for
        # big hidden widths single-buffer them (matters against v7x's 64 MiB).
        wspec_kwargs = dict(pipeline_mode=pl.Buffered(1))

    cost = pl.CostEstimate(
        flops=2 * N * HW * (Cin * Chid + Chid * Cout),
        transcendentals=0,
        bytes_accessed=N * HW * (Cin * x_isz + Cout * o_isz) + weight_bytes,
    )

    out = pl.pallas_call(
        _mlp_kernel,
        out_shape=jax.ShapeDtypeStruct((N, Cout, HW), out_dtype),
        grid_spec=pltpu.PrefetchScalarGridSpec(
            num_scalar_prefetch=0,
            grid=grid,
            in_specs=[
                pl.BlockSpec((nb, Cin, ts), lambda n, s: (n, 0, s)),
                pl.BlockSpec((Chid, Cin), lambda n, s: (0, 0), **wspec_kwargs),
                pl.BlockSpec((Chid, 1), lambda n, s: (0, 0)),
                pl.BlockSpec((Cout, Chid), lambda n, s: (0, 0), **wspec_kwargs),
                pl.BlockSpec((Cout, 1), lambda n, s: (0, 0)),
            ],
            out_specs=pl.BlockSpec((nb, Cout, ts), lambda n, s: (n, 0, s)),
        ),
        compiler_params=pltpu.CompilerParams(
            dimension_semantics=("parallel", "parallel"),
            vmem_limit_bytes=vmem_limit,
        ),
        cost_estimate=cost,
    )(x, w1, b1_2d, w2, b2_2d)

    return out.reshape(N, Cout, H, W)


def init_mlp_params(key, network_depth, in_features, hidden_features=None,
                    out_features=None, dtype=jnp.float32):
    """Deterministic init matching Mlp._init_weights (trunc_normal, zero bias)."""
    out_features = out_features or in_features
    hidden_features = hidden_features or in_features
    gain = (8 * network_depth) ** (-1 / 4)

    def conv1x1_weight(k, cin, cout):
        # PyTorch weight shape (cout, cin, 1, 1): fan_in = cin, fan_out = cout.
        std = gain * math.sqrt(2.0 / float(cin + cout))
        return jax.random.truncated_normal(k, -2.0, 2.0, (cout, cin), dtype) * std

    k1, k2 = jax.random.split(key)
    w1 = conv1x1_weight(k1, in_features, hidden_features)      # (Chid, Cin)
    b1 = jnp.zeros((hidden_features,), dtype)
    w2 = conv1x1_weight(k2, hidden_features, out_features)     # (Cout, Chid)
    b2 = jnp.zeros((out_features,), dtype)
    return w1, b1, w2, b2


if __name__ == "__main__":
    key = jax.random.PRNGKey(0)
    kx, kp = jax.random.split(key)

    # Small shapes consistent with Mlp forward: NCHW input.
    N, Cin, H, W = 2, 4, 16, 16
    network_depth = 8
    hidden_features = 32

    x = jax.random.normal(kx, (N, Cin, H, W), jnp.float32)
    w1, b1, w2, b2 = init_mlp_params(kp, network_depth, Cin,
                                     hidden_features=hidden_features)
    Cout = w2.shape[0]

    # Plain-JAX reference (1x1 conv == channel matmul).
    x_flat = x.reshape(N, Cin, H * W)
    h_ref = jnp.maximum(jnp.einsum("hc,ncs->nhs", w1, x_flat) + b1[None, :, None], 0.0)
    ref = (jnp.einsum("oh,nhs->nos", w2, h_ref) + b2[None, :, None]).reshape(N, Cout, H, W)

    # f32 path.  Tolerance covers the MXU's default f32 precision mode (bf16
    # passes) which may differ slightly between the Pallas dot and XLA einsum.
    out = mlp_pallas(x, w1, b1, w2, b2)
    out = jax.block_until_ready(out)
    assert out.shape == (N, Cout, H, W)
    assert jnp.allclose(out, ref, atol=2e-3, rtol=2e-3)

    # bf16 compute + bf16 store path (f32 accumulation inside the kernel).
    out_bf16 = mlp_pallas(x, w1, b1, w2, b2,
                          compute_dtype=jnp.bfloat16, out_dtype=jnp.bfloat16)
    out_bf16 = jax.block_until_ready(out_bf16)
    assert out_bf16.shape == (N, Cout, H, W)
    assert out_bf16.dtype == jnp.bfloat16
    out_bf16_f32 = out_bf16.astype(jnp.float32)
    assert bool(jnp.all(jnp.isfinite(out_bf16_f32)))
    assert jnp.allclose(out_bf16_f32, ref, atol=5e-2, rtol=5e-2)

    print("KERNEL_OK")
</pallas_src>

<mosaic_0001>
module attributes {stable_mosaic.version = 11 : i64} {
  func.func @_mlp_kernel(%arg0: i32, %arg1: i32, %arg2: memref<1x4x256xf32, #tpu.memory_space<vmem>>, %arg3: memref<32x4xf32, #tpu.memory_space<vmem>>, %arg4: memref<32x1xf32, #tpu.memory_space<vmem>>, %arg5: memref<4x32xf32, #tpu.memory_space<vmem>>, %arg6: memref<4x1xf32, #tpu.memory_space<vmem>>, %arg7: memref<1x4x256xf32, #tpu.memory_space<vmem>>) attributes {dimension_semantics = [#tpu.dimension_semantics<parallel>, #tpu.dimension_semantics<parallel>], iteration_bounds = array<i64: 2, 1>, scalar_prefetch = 0 : i64, scratch_operands = 0 : i64, tpu.core_type = #tpu.core_type<tc>, window_params = [{transform_indices = @transform_0, window_bounds = array<i64: 1, 4, 256>}, {pipeline_mode = #tpu.pipeline_mode<synchronous>, transform_indices = @transform_1, window_bounds = array<i64: 32, 4>}, {pipeline_mode = #tpu.pipeline_mode<synchronous>, transform_indices = @transform_2, window_bounds = array<i64: 32, 1>}, {pipeline_mode = #tpu.pipeline_mode<synchronous>, transform_indices = @transform_3, window_bounds = array<i64: 4, 32>}, {pipeline_mode = #tpu.pipeline_mode<synchronous>, transform_indices = @transform_4, window_bounds = array<i64: 4, 1>}, {transform_indices = @transform_5, window_bounds = array<i64: 1, 4, 256>}]} {
    %c0 = arith.constant 0 : index
    %c0_0 = arith.constant 0 : index
    %0 = vector.load %arg3[%c0, %c0_0] : memref<32x4xf32, #tpu.memory_space<vmem>>, vector<32x4xf32>
    %c0_1 = arith.constant 0 : index
    %c0_2 = arith.constant 0 : index
    %1 = vector.load %arg5[%c0_1, %c0_2] : memref<4x32xf32, #tpu.memory_space<vmem>>, vector<4x32xf32>
    %c0_3 = arith.constant 0 : index
    %c0_4 = arith.constant 0 : index
    %2 = vector.load %arg4[%c0_3, %c0_4] : memref<32x1xf32, #tpu.memory_space<vmem>>, vector<32x1xf32>
    %c0_5 = arith.constant 0 : index
    %c0_6 = arith.constant 0 : index
    %3 = vector.load %arg6[%c0_5, %c0_6] : memref<4x1xf32, #tpu.memory_space<vmem>>, vector<4x1xf32>
    %c0_7 = arith.constant 0 : index
    %c0_8 = arith.constant 0 : index
    %c0_9 = arith.constant 0 : index
    %4 = vector.load %arg2[%c0_7, %c0_8, %c0_9] : memref<1x4x256xf32, #tpu.memory_space<vmem>>, vector<1x4x256xf32>
    %5 = vector.shape_cast %4 : vector<1x4x256xf32> to vector<4x256xf32>
    %cst = arith.constant dense<0.000000e+00> : vector<32x256xf32>
    %6 = tpu.matmul %0, %5, %cst {dimension_numbers = #tpu.dot_dimension_numbers<[1], [0], [0], [1], [0, 0, 1, 1], [], []>} : vector<32x4xf32>, vector<4x256xf32>, vector<32x256xf32> -> vector<32x256xf32>
    %7 = vector.broadcast %2 : vector<32x1xf32> to vector<32x256xf32>
    %8 = arith.addf %6, %7 : vector<32x256xf32>
    %cst_10 = arith.constant 0.000000e+00 : f32
    %9 = vector.broadcast %cst_10 : f32 to vector<32x256xf32>
    %10 = arith.maximumf %8, %9 : vector<32x256xf32>
    %cst_11 = arith.constant dense<0.000000e+00> : vector<4x256xf32>
    %11 = tpu.matmul %1, %10, %cst_11 {dimension_numbers = #tpu.dot_dimension_numbers<[1], [0], [0], [1], [0, 0, 1, 1], [], []>} : vector<4x32xf32>, vector<32x256xf32>, vector<4x256xf32> -> vector<4x256xf32>
    %12 = vector.broadcast %3 : vector<4x1xf32> to vector<4x256xf32>
    %13 = arith.addf %11, %12 : vector<4x256xf32>
    %c0_12 = arith.constant 0 : index
    %c0_13 = arith.constant 0 : index
    %c0_14 = arith.constant 0 : index
    %14 = vector.load %arg7[%c0_12, %c0_13, %c0_14] : memref<1x4x256xf32, #tpu.memory_space<vmem>>, vector<1x4x256xf32>
    %15 = vector.shape_cast %14 : vector<1x4x256xf32> to vector<4x256xf32>
    %16 = vector.shape_cast %13 : vector<4x256xf32> to vector<1x4x256xf32>
    tpu.vector_store %arg7[%c0_12, %c0_13, %c0_14], %16 {strides = array<i32>} : memref<1x4x256xf32, #tpu.memory_space<vmem>>, vector<1x4x256xf32>,
    return
  }
  func.func @transform_0(%arg0: i32, %arg1: i32) -> (i32, i32, i32) {
    %c0_i32 = arith.constant 0 : i32
    %c0_i32_0 = arith.constant 0 : i32
    return %arg0, %c0_i32, %arg1 : i32, i32, i32
  }
  func.func @transform_1(%arg0: i32, %arg1: i32) -> (i32, i32) {
    %c0_i32 = arith.constant 0 : i32
    %c0_i32_0 = arith.constant 0 : i32
    %c0_i32_1 = arith.constant 0 : i32
    return %c0_i32, %c0_i32_0 : i32, i32
  }
  func.func @transform_2(%arg0: i32, %arg1: i32) -> (i32, i32) {
    %c0_i32 = arith.constant 0 : i32
    %c0_i32_0 = arith.constant 0 : i32
    %c0_i32_1 = arith.constant 0 : i32
    return %c0_i32, %c0_i32_0 : i32, i32
  }
  func.func @transform_3(%arg0: i32, %arg1: i32) -> (i32, i32) {
    %c0_i32 = arith.constant 0 : i32
    %c0_i32_0 = arith.constant 0 : i32
    %c0_i32_1 = arith.constant 0 : i32
    return %c0_i32, %c0_i32_0 : i32, i32
  }
  func.func @transform_4(%arg0: i32, %arg1: i32) -> (i32, i32) {
    %c0_i32 = arith.constant 0 : i32
    %c0_i32_0 = arith.constant 0 : i32
    %c0_i32_1 = arith.constant 0 : i32
    return %c0_i32, %c0_i32_0 : i32, i32
  }
  func.func @transform_5(%arg0: i32, %arg1: i32) -> (i32, i32, i32) {
    %c0_i32 = arith.constant 0 : i32
    %c0_i32_0 = arith.constant 0 : i32
    return %arg0, %c0_i32, %arg1 : i32, i32, i32
  }
}

</mosaic_0001>

<llo_original>
// kernel: tpu_custom_call.1
$region0: #{tpu_custom_call.1}
  #allocation0 [shape = 'u32[]', space=smem, size = 0x4, offset = 0x4, fixed_abs, tag = 'smem constant byte address 0x4 - core index']
  #allocation1 [shape = 'u32[72,128]{1,0:T(1,128)}', space=vmem, size = 0x9000, scoped, tag = 'internal scratch']
  %s0 = inlined_call_operand.vmem [shape: f32[2,4,256], index: 0, kind: input, shape index: {}]
  %s1 = inlined_call_operand.vmem [shape: f32[32,4], index: 1, kind: input, shape index: {}]
  %s2 = inlined_call_operand.vmem [shape: f32[32,1], index: 2, kind: input, shape index: {}]
  %s3 = inlined_call_operand.vmem [shape: f32[4,32], index: 3, kind: input, shape index: {}]
  %s4 = inlined_call_operand.vmem [shape: f32[4,1], index: 4, kind: input, shape index: {}]
  %s5 = inlined_call_operand.hbm [shape: f32[2,4,256], index: 5, kind: output, shape index: {}]
  %s6 = sld [smem:[#allocation0]]
  $region53: #{tpu_custom_call.1} parent=0
    _
  %s8 = ssub.s32 1, %s6
  %s9 = scalar_select 0, %s8, %s6
  $region1: #{tpu_custom_call.1} parent=0
    #allocation2 [shape = 'u8[8192]{0}', space=vmem, size = 0x2000, scoped, tag = 'output window, operand 0']
    #allocation3 [shape = 's32[2]{0}', space=sflag, size = 0x8, scoped, tag = 'scoped memory for tpu_custom_call.1']
    %10 = vsyncpa [#allocation3], 0
    %s11 = scalar_lea.sflag [#allocation3], 1
    %12 = vsyncpa %s11, 0
    loop: start=0, step=1, limit=4
    $region2: #{tpu_custom_call.1} parent=1 // loop_pre_header
      _
    $region3: #{tpu_custom_call.1} parent=1 // loop_header
      %s14 = sphi 0, %s18
      %p15 = scmp.ge.s32.totalorder %s14, 4
      %s21 = sphi 0, %s33
      %s22 = sphi 0, %s29
      %s23 = sphi 0, %s21
      %s24 = sphi 0, %s22
      %s25 = sphi 0, %s23
      %s26 = sphi 0, %s24
      %s38 = sphi 0, %s40
      %s41 = sphi 0, %s38
      %s42 = sphi 0, %s41
      %s58 = sphi 0, %s42
      %s62 = sphi 0, %s62
      %s64 = sphi 0, %s62
      %s65 = sphi 0, %s64
      %s79 = sphi 0, %s65
      %s83 = sphi 0, %s83
      %s85 = sphi 0, %s83
      %s86 = sphi 0, %s85
      %s100 = sphi 0, %s86
      %s104 = sphi 0, %s104
      %s106 = sphi 0, %s104
      %s107 = sphi 0, %s106
      %s121 = sphi 0, %s107
      %s125 = sphi 0, %s125
      %s127 = sphi 0, %s125
      %s128 = sphi 0, %s127
      %s142 = sphi 0, %s128
      %s150 = sphi 0, %s152
      %s153 = sphi 0, %s150
      %s154 = sphi 0, %s153
      %s170 = sphi 0, %s154
    $region4: #{tpu_custom_call.1} parent=1 // loop_header_branch
      %17 = sbr.rel (%p15) target = $region8
    $region5: #{tpu_custom_call.1} parent=1 // loop_body
      %s19 = ssub.s32 %s14, 1
      %s20 = ssub.s32 %s14, 2
      %s27 = sadd.s32 1, %s22
      %p28 = scmp.ge.s32.totalorder %s27, 1
      %s29 = scalar_select %p28, 0, %s27
      %s30 = sadd.s32 1, %s21
      %s31 = scalar_select %p28, %s30, %s21
      %p32 = scmp.ge.s32.totalorder %s31, 2
      %s33 = scalar_select %p32, 0, %s31
      %s34 = ssub.s32 %s21, %s33
      %s35 = ssub.s32 %s22, %s29
      %s36 = sor.u32 %s34, %s35
      %p37 = scmp.eq.s32.totalorder %s36, 0
      %s39 = sadd.s32 %s38, 1
      %s40 = scalar_select %p37, %s38, %s39
      %p43 = pneg %p37
      %p44 = scmp.eq.s32.totalorder %s14, 1
      %p45 = por %p43, %p44
      %p46 = scmp.ne.s32.totalorder %s38, %s41
      %p47 = scmp.eq.s32.totalorder %s14, 0
      %p48 = por %p46, %p47
      %p49 = scmp.ne.s32.totalorder %s38, %s41
      %p50 = scmp.eq.s32.totalorder %s19, 1
      %p51 = por %p49, %p50
      %p52 = scmp.ne.s32.totalorder %s41, %s42
      %p53 = scmp.eq.s32.totalorder %s19, 0
      %p54 = por %p52, %p53
      %p55 = scmp.ne.s32.totalorder %s41, %s42
      %p56 = scmp.eq.s32.totalorder %s20, 1
      %p57 = por %p55, %p56
      %p59 = scmp.ne.s32.totalorder %s42, %s58
      %p60 = scmp.eq.s32.totalorder %s20, 0
      %p61 = por %p59, %p60
      %s63 = sadd.s32 %s62, 1
      %p66 = scmp.eq.s32.totalorder %s14, 1
      %p67 = scmp.ne.s32.totalorder %s62, %s64
      %p68 = scmp.eq.s32.totalorder %s14, 0
      %p69 = por %p67, %p68
      %p70 = scmp.ne.s32.totalorder %s62, %s64
      %p71 = scmp.eq.s32.totalorder %s19, 1
      %p72 = por %p70, %p71
      %p73 = scmp.ne.s32.totalorder %s64, %s65
      %p74 = scmp.eq.s32.totalorder %s19, 0
      %p75 = por %p73, %p74
      %p76 = scmp.ne.s32.totalorder %s64, %s65
      %p77 = scmp.eq.s32.totalorder %s20, 1
      %p78 = por %p76, %p77
      %p80 = scmp.ne.s32.totalorder %s65, %s79
      %p81 = scmp.eq.s32.totalorder %s20, 0
      %p82 = por %p80, %p81
      %s84 = sadd.s32 %s83, 1
      %p87 = scmp.eq.s32.totalorder %s14, 1
      %p88 = scmp.ne.s32.totalorder %s83, %s85
      %p89 = scmp.eq.s32.totalorder %s14, 0
      %p90 = por %p88, %p89
      %p91 = scmp.ne.s32.totalorder %s83, %s85
      %p92 = scmp.eq.s32.totalorder %s19, 1
      %p93 = por %p91, %p92
      %p94 = scmp.ne.s32.totalorder %s85, %s86
      %p95 = scmp.eq.s32.totalorder %s19, 0
      %p96 = por %p94, %p95
      %p97 = scmp.ne.s32.totalorder %s85, %s86
      %p98 = scmp.eq.s32.totalorder %s20, 1
      %p99 = por %p97, %p98
      %p101 = scmp.ne.s32.totalorder %s86, %s100
      %p102 = scmp.eq.s32.totalorder %s20, 0
      %p103 = por %p101, %p102
      %s105 = sadd.s32 %s104, 1
      %p108 = scmp.eq.s32.totalorder %s14, 1
      %p109 = scmp.ne.s32.totalorder %s104, %s106
      %p110 = scmp.eq.s32.totalorder %s14, 0
      %p111 = por %p109, %p110
      %p112 = scmp.ne.s32.totalorder %s104, %s106
      %p113 = scmp.eq.s32.totalorder %s19, 1
      %p114 = por %p112, %p113
      %p115 = scmp.ne.s32.totalorder %s106, %s107
      %p116 = scmp.eq.s32.totalorder %s19, 0
      %p117 = por %p115, %p116
      %p118 = scmp.ne.s32.totalorder %s106, %s107
      %p119 = scmp.eq.s32.totalorder %s20, 1
      %p120 = por %p118, %p119
      %p122 = scmp.ne.s32.totalorder %s107, %s121
      %p123 = scmp.eq.s32.totalorder %s20, 0
      %p124 = por %p122, %p123
      %s126 = sadd.s32 %s125, 1
      %p129 = scmp.eq.s32.totalorder %s14, 1
      %p130 = scmp.ne.s32.totalorder %s125, %s127
      %p131 = scmp.eq.s32.totalorder %s14, 0
      %p132 = por %p130, %p131
      %p133 = scmp.ne.s32.totalorder %s125, %s127
      %p134 = scmp.eq.s32.totalorder %s19, 1
      %p135 = por %p133, %p134
      %p136 = scmp.ne.s32.totalorder %s127, %s128
      %p137 = scmp.eq.s32.totalorder %s19, 0
      %p138 = por %p136, %p137
      %p139 = scmp.ne.s32.totalorder %s127, %s128
      %p140 = scmp.eq.s32.totalorder %s20, 1
      %p141 = por %p139, %p140
      %p143 = scmp.ne.s32.totalorder %s128, %s142
      %p144 = scmp.eq.s32.totalorder %s20, 0
      %p145 = por %p143, %p144
      %s146 = ssub.s32 %s21, %s33
      %s147 = ssub.s32 %s22, %s29
      %s148 = sor.u32 %s146, %s147
      %p149 = scmp.eq.s32.totalorder %s148, 0
      %s151 = sadd.s32 %s150, 1
      %s152 = scalar_select %p149, %s150, %s151
      %p155 = pneg %p149
      %p156 = scmp.eq.s32.totalorder %s14, 1
      %p157 = por %p155, %p156
      %p158 = scmp.ne.s32.totalorder %s150, %s153
      %p159 = scmp.eq.s32.totalorder %s14, 0
      %p160 = por %p158, %p159
      %p161 = scmp.ne.s32.totalorder %s150, %s153
      %p162 = scmp.eq.s32.totalorder %s19, 1
      %p163 = por %p161, %p162
      %p164 = scmp.ne.s32.totalorder %s153, %s154
      %p165 = scmp.eq.s32.totalorder %s19, 0
      %p166 = por %p164, %p165
      %p167 = scmp.ne.s32.totalorder %s153, %s154
      %p168 = scmp.eq.s32.totalorder %s20, 1
      %p169 = por %p167, %p168
      %p171 = scmp.ne.s32.totalorder %s154, %s170
      %p172 = scmp.eq.s32.totalorder %s20, 0
      %p173 = por %p171, %p172
      %p174 = scmp.le.s32.totalorder 1, %s14
      %p175 = scmp.lt.s32.totalorder %s14, 3
      %p176 = pnand %p174, %p175
      %p177 = pneg %p176
      // Predicated region
      $region9: #{tpu_custom_call.1} parent=5 // pred_check
        _
      $region10: #{tpu_custom_call.1} parent=5 // pred_check_branch
        %179 = sbr.rel (%p176) target = $region12
      $region11: #{tpu_custom_call.1} parent=5 // pred_region
        %s180 = ssub.s32 %s14, 1
        // Predicated region
        $region13: #{tpu_custom_call.1} parent=11 // pred_check
          %p181 = pneg %p75
        $region14: #{tpu_custom_call.1} parent=11 // pred_check_branch
          %183 = sbr.rel (%p181) target = $region16
        $region15: #{tpu_custom_call.1} parent=11 // pred_region
          _
        $region16: #{tpu_custom_call.1} parent=11 // pred_fallthru
          _
        // Predicated region
        $region17: #{tpu_custom_call.1} parent=11 // pred_check
          %p184 = pneg %p96
        $region18: #{tpu_custom_call.1} parent=11 // pred_check_branch
          %186 = sbr.rel (%p184) target = $region20
        $region19: #{tpu_custom_call.1} parent=11 // pred_region
          _
        $region20: #{tpu_custom_call.1} parent=11 // pred_fallthru
          _
        // Predicated region
        $region21: #{tpu_custom_call.1} parent=11 // pred_check
          %p187 = pneg %p117
        $region22: #{tpu_custom_call.1} parent=11 // pred_check_branch
          %189 = sbr.rel (%p187) target = $region24
        $region23: #{tpu_custom_call.1} parent=11 // pred_region
          _
        $region24: #{tpu_custom_call.1} parent=11 // pred_fallthru
          _
        // Predicated region
        $region25: #{tpu_custom_call.1} parent=11 // pred_check
          %p190 = pneg %p138
        $region26: #{tpu_custom_call.1} parent=11 // pred_check_branch
          %192 = sbr.rel (%p190) target = $region28
        $region27: #{tpu_custom_call.1} parent=11 // pred_region
          _
        $region28: #{tpu_custom_call.1} parent=11 // pred_fallthru
          _
      $region12: #{tpu_custom_call.1} parent=5 // pred_fallthru
        _
      %p193 = scmp.lt.s32.totalorder %s14, 2
      // Predicated region
      $region29: #{tpu_custom_call.1} parent=5 // pred_check
        %p194 = pneg %p193
      $region30: #{tpu_custom_call.1} parent=5 // pred_check_branch
        %196 = sbr.rel (%p194) target = $region32
      $region31: #{tpu_custom_call.1} parent=5 // pred_region
        // Predicated region
        $region33: #{tpu_custom_call.1} parent=31 // pred_check
          %p197 = pneg %p48
        $region34: #{tpu_custom_call.1} parent=31 // pred_check_branch
          %199 = sbr.rel (%p197) target = $region36
        $region35: #{tpu_custom_call.1} parent=31 // pred_region
          %s200 = smul.u32 2, %s22
          %p201 = scmp.lt.s32.totalorder %s21, 1
          %s202 = scalar_select %p201, %s21, 1
          %p203 = scmp.lt.s32.totalorder %s200, 1
          %s204 = scalar_select %p203, %s200, 1
          %s205 = smul.addr %s202, 2
          %s206 = sadd.s32 %s204, %s205
          %s207 = smul.addr %s206, 4
          %s208 = scalar_lea.vmem %s0, %s207
          %s209 = smul.u32 2, %s22
        $region36: #{tpu_custom_call.1} parent=31 // pred_fallthru
          _
      $region32: #{tpu_custom_call.1} parent=5 // pred_fallthru
        _
      %p210 = scmp.le.s32.totalorder 1, %s14
      %p211 = scmp.lt.s32.totalorder %s14, 3
      %p212 = pnand %p210, %p211
      %p213 = pneg %p212
      // Predicated region
      $region37: #{tpu_custom_call.1} parent=5 // pred_check
        _
      $region38: #{tpu_custom_call.1} parent=5 // pred_check_branch
        %215 = sbr.rel (%p212) target = $region40
      $region39: #{tpu_custom_call.1} parent=5 // pred_region
        %s216 = ssub.s32 %s14, 1
        %s217 = smul.u32 2, %s24
        %p218 = scmp.lt.s32.totalorder %s23, 1
        %s219 = scalar_select %p218, %s23, 1
        %p220 = scmp.lt.s32.totalorder %s217, 1
        %s221 = scalar_select %p220, %s217, 1
        %s222 = smul.addr %s219, 2
        %s223 = sadd.s32 %s221, %s222
        %s224 = smul.addr %s223, 4
        %s225 = scalar_lea.vmem %s0, %s224
        %p226 = pneg %p54
        %p227 = pneg %p51
        %p228 = pneg %p75
        %p229 = pneg %p72
        %p230 = pneg %p96
        %p231 = pneg %p93
        %p232 = pneg %p117
        %p233 = pneg %p114
        %p234 = pneg %p138
        %p235 = pneg %p135
        %p236 = pneg %p166
        %p237 = pneg %p163
        %s238 = sand.u32 %s153, 1
        %s239 = scalar_lea.sflag [#allocation3], %s238
        %s240 = sand.u32 %s153, 1
        %s241 = smul.addr %s240, 8
        %s242 = scalar_lea.vmem [#allocation2], %s241
        %s243 = smul.u32 2, %s24
        %p244 = scmp.lt.s32.totalorder %s23, 1
        %s245 = scalar_select %p244, %s23, 1
        %p246 = scmp.lt.s32.totalorder %s243, 1
        %s247 = scalar_select %p246, %s243, 1
        %s248 = smul.addr %s245, 2
        %s249 = sadd.s32 %s247, %s248
        %s250 = smul.addr %s249, 4
        %s251 = scalar_lea.vmem %s0, %s250
        %s252 = smul.u32 2, %s24
        %s253 = smul.u32 2, %s24
        %v254 = vld [vmem:[%s1] sm:$0xff]
        %v255 = vld [vmem:[%s1 + $0x8] sm:$0xff]
        %v256 = vld [vmem:[%s1 + $0x10] sm:$0xff]
        %v257 = vld [vmem:[%s1 + $0x18] sm:$0xff]
        %v258 = vld [vmem:[%s3] sm:$0xf]
        %v259 = vld [vmem:[%s2] sm:$0xff]
        %v260 = vld [vmem:[%s2 + $0x8] sm:$0xff]
        %v261 = vld [vmem:[%s2 + $0x10] sm:$0xff]
        %v262 = vld [vmem:[%s2 + $0x18] sm:$0xff]
        %v263 = vld [vmem:[%s4] sm:$0xf]
        %v264 = vld [vmem:[%s251] sm:$0xff]
        %266 = vset.pattern.permute.xlu0 0
        %267 = vperm.xlu0 %266, %v259
        %v268 = vpop.permute.xlu0 %267
        %271 = vset.pattern.permute.xlu0 0
        %272 = vperm.xlu0 %271, %v260
        %v273 = vpop.permute.xlu0 %272
        %276 = vset.pattern.permute.xlu0 0
        %277 = vperm.xlu0 %276, %v261
        %v278 = vpop.permute.xlu0 %277
        %281 = vset.pattern.permute.xlu0 0
        %282 = vperm.xlu0 %281, %v262
        %v283 = vpop.permute.xlu0 %282
        %286 = vst [vmem:[#allocation1] ss:$2 sm:$0xff] %v264
        %v287 = vld.sshfl [vmem:[#allocation1] sm:$0xff pattern:$0x75316420]
        %v288 = vld.sshfl [vmem:[#allocation1 + $0x8] sm:$0xff pattern:$0x75316420]
        %vm289 = vcmask 31744
        %v291 = vsel %vm289, %v254, 0
        %v294 = vsel %vm289, %v255, 0
        %v297 = vsel %vm289, %v256, 0
        %v300 = vsel %vm289, %v257, 0
        %vm302 = vcmask 1043456
        %v303 = vsel %vm302, %v287, 0
        %v305 = vsel %vm302, %v288, 0
        %307 = vmatpush.msra.mxu0 0.0
        %308 = vmatpush.msra.mxu0 0.0
        %309 = vmatpush.msra.mxu0 0.0
        %310 = vmatpush.msra.mxu0 0.0
        %311 = vmatpush.msra.mxu0 0.0
        %312 = vmatpush.msra.mxu0 0.0
        %313 = vmatpush.msra.mxu0 0.0
        %314 = vmatpush.msra.mxu0 0.0
        %315 = vmatpush.msra.mxu0 0.0
        %316 = vmatpush.msra.mxu0 0.0
        %317 = vmatpush.msra.mxu0 0.0
        %318 = vmatpush.msra.mxu0 0.0
        %319 = vmatpush.msra.mxu0 0.0
        %320 = vmatpush.msra.mxu0 0.0
        %321 = vmatpush.msra.mxu0 0.0
        %322 = vmatpush.msra.mxu0 %v303
        %323 = vmatmul.f32.gmra.mxu0 %v291
        %v324 = vpop.f32.mrf.mxu0
        %v325 = vadd.f32 %v268, %v324
        %326 = vmatmul.f32.gmra.mxu0 %v294
        %v327 = vpop.f32.mrf.mxu0
        %v328 = vadd.f32 %v273, %v327
        %329 = vmatmul.f32.gmra.mxu0 %v297
        %v330 = vpop.f32.mrf.mxu0
        %v331 = vadd.f32 %v278, %v330
        %332 = vmatmul.f32.gmra.mxu0 %v300
        %v333 = vpop.f32.mrf.mxu0
        %v334 = vadd.f32 %v283, %v333
        %335 = vdwg.mxu0
        %336 = vmatpush.msra.mxu0 0.0
        %337 = vmatpush.msra.mxu0 0.0
        %338 = vmatpush.msra.mxu0 0.0
        %339 = vmatpush.msra.mxu0 0.0
        %340 = vmatpush.msra.mxu0 0.0
        %341 = vmatpush.msra.mxu0 0.0
        %342 = vmatpush.msra.mxu0 0.0
        %343 = vmatpush.msra.mxu0 0.0
        %344 = vmatpush.msra.mxu0 0.0
        %345 = vmatpush.msra.mxu0 0.0
        %346 = vmatpush.msra.mxu0 0.0
        %347 = vmatpush.msra.mxu0 0.0
        %348 = vmatpush.msra.mxu0 0.0
        %349 = vmatpush.msra.mxu0 0.0
        %350 = vmatpush.msra.mxu0 0.0
        %351 = vmatpush.msra.mxu0 %v305
        %352 = vmatmul.f32.gmra.mxu0 %v291
        %v353 = vpop.f32.mrf.mxu0
        %v354 = vadd.f32 %v268, %v353
        %355 = vmatmul.f32.gmra.mxu0 %v294
        %v356 = vpop.f32.mrf.mxu0
        %v357 = vadd.f32 %v273, %v356
        %358 = vmatmul.f32.gmra.mxu0 %v297
        %v359 = vpop.f32.mrf.mxu0
        %v360 = vadd.f32 %v278, %v359
        %361 = vmatmul.f32.gmra.mxu0 %v300
        %v362 = vpop.f32.mrf.mxu0
        %v363 = vadd.f32 %v283, %v362
        %364 = vdwg.mxu0
        %v365 = vmax.f32 %v325, 0.0
        %v366 = vmax.f32 %v354, 0.0
        %v367 = vmax.f32 %v328, 0.0
        %v368 = vmax.f32 %v357, 0.0
        %v369 = vmax.f32 %v331, 0.0
        %v370 = vmax.f32 %v360, 0.0
        %v371 = vmax.f32 %v334, 0.0
        %v372 = vmax.f32 %v363, 0.0
        %374 = vset.pattern.permute.xlu0 0
        %375 = vperm.xlu0 %374, %v263
        %v376 = vpop.permute.xlu0 %375
        %vm378 = vcmask 261120
        %v380 = vsel %vm378, %v258, 0
        %382 = vmatpush.msra.mxu0 0.0
        %383 = vmatpush.msra.mxu0 0.0
        %384 = vmatpush.msra.mxu0 0.0
        %385 = vmatpush.msra.mxu0 0.0
        %386 = vmatpush.msra.mxu0 0.0
        %387 = vmatpush.msra.mxu0 0.0
        %388 = vmatpush.msra.mxu0 0.0
        %389 = vmatpush.msra.mxu0 0.0
        %390 = vmatpush.msra.mxu0 0.0
        %391 = vmatpush.msra.mxu0 0.0
        %392 = vmatpush.msra.mxu0 0.0
        %393 = vmatpush.msra.mxu0 0.0
        %394 = vmatpush.msra.mxu0 %v371
        %395 = vmatpush.msra.mxu0 %v369
        %396 = vmatpush.msra.mxu0 %v367
        %397 = vmatpush.msra.mxu0 %v365
        %398 = vmatmul.f32.gmra.mxu0 %v380
        %v399 = vpop.f32.mrf.mxu0
        %v400 = vadd.f32 %v376, %v399
        %401 = vdwg.mxu0
        %402 = vmatpush.msra.mxu0 0.0
        %403 = vmatpush.msra.mxu0 0.0
        %404 = vmatpush.msra.mxu0 0.0
        %405 = vmatpush.msra.mxu0 0.0
        %406 = vmatpush.msra.mxu0 0.0
        %407 = vmatpush.msra.mxu0 0.0
        %408 = vmatpush.msra.mxu0 0.0
        %409 = vmatpush.msra.mxu0 0.0
        %410 = vmatpush.msra.mxu0 0.0
        %411 = vmatpush.msra.mxu0 0.0
        %412 = vmatpush.msra.mxu0 0.0
        %413 = vmatpush.msra.mxu0 0.0
        %414 = vmatpush.msra.mxu0 %v372
        %415 = vmatpush.msra.mxu0 %v370
        %416 = vmatpush.msra.mxu0 %v368
        %417 = vmatpush.msra.mxu0 %v366
        %418 = vmatmul.f32.gmra.mxu0 %v380
        %v419 = vpop.f32.mrf.mxu0
        %v420 = vadd.f32 %v376, %v419
        %421 = vdwg.mxu0
        %v424 = vrot.slane %v420, 4
        %v425 = vsel %vm302, %v400, %v424
        %427 = vst [vmem:[%s242] sm:$0xff] %v425
        %s428 = sand.u32 %s153, 1
        %s429 = scalar_lea.sflag [#allocation3], %s428
        %s430 = sand.u32 %s153, 1
        %s431 = smul.addr %s430, 8
        %s432 = scalar_lea.vmem [#allocation2], %s431
        // Predicated region
        $region41: #{tpu_custom_call.1} parent=39 // pred_check
          %p433 = pneg %p163
        $region42: #{tpu_custom_call.1} parent=39 // pred_check_branch
          %435 = sbr.rel (%p433) target = $region44
        $region43: #{tpu_custom_call.1} parent=39 // pred_region
          %s436 = smul.u32 2, %s24
          %438 = vsyncadd %s429, 0
          %s439 = smul.addr %s23, 2
          %s440 = sadd.s32 %s436, %s439
          %s441 = smul.addr %s440, 4
          %s442 = scalar_lea.hbm %s5, %s441
          %s444 = sshll.u32 %s432, 4
          %s445 = int_to_ptr.vmem [resolvable:$true] %s444
          %s446 = sshll.u32 %s442, 4
          %s447 = int_to_ptr.hbm [resolvable:$true] %s446
          %449 = dma.vmem_to_hbm [thread:$0]  %s445, 128, %s447, %s429
        $region44: #{tpu_custom_call.1} parent=39 // pred_fallthru
          _
      $region40: #{tpu_custom_call.1} parent=5 // pred_fallthru
        _
      %p450 = scmp.le.s32.totalorder 2, %s14
      // Predicated region
      $region45: #{tpu_custom_call.1} parent=5 // pred_check
        %p451 = pneg %p450
      $region46: #{tpu_custom_call.1} parent=5 // pred_check_branch
        %453 = sbr.rel (%p451) target = $region48
      $region47: #{tpu_custom_call.1} parent=5 // pred_region
        %s454 = ssub.s32 %s14, 2
        // Predicated region
        $region49: #{tpu_custom_call.1} parent=47 // pred_check
          %p455 = pneg %p169
        $region50: #{tpu_custom_call.1} parent=47 // pred_check_branch
          %457 = sbr.rel (%p455) target = $region52
        $region51: #{tpu_custom_call.1} parent=47 // pred_region
          %s458 = sand.u32 %s154, 1
          %s459 = scalar_lea.sflag [#allocation3], %s458
          %s460 = sand.u32 %s154, 1
          %s461 = smul.addr %s460, 8
          %s462 = scalar_lea.vmem [#allocation2], %s461
          %464 = dma.done %s459, 128
        $region52: #{tpu_custom_call.1} parent=47 // pred_fallthru
          _
      $region48: #{tpu_custom_call.1} parent=5 // pred_fallthru
        _
    $region6: #{tpu_custom_call.1} parent=1 // loop_footer
      %s18 = sadd.s32 1, %s14
    $region7: #{tpu_custom_call.1} parent=1 // loop_footer_branch
      %13 = sbr.rel target = $region3
    $region8: #{tpu_custom_call.1} parent=1 // loop_exit
      _
    %465 = vsyncpa [#allocation3], 1
    %s466 = scalar_lea.sflag [#allocation3], 1
    %467 = vsyncpa %s466, 1

</llo_original>
